<compile_context>
chip_gen: v6e
topology: v6e:2x2x1
jax: 0.10.0
libtpu: 0.0.40
codegen_flags: <defaults>
</compile_context>

<pallas_src>
import functools

import jax
import jax.numpy as jnp
from jax.experimental import pallas as pl
from jax.experimental.pallas import tpu as pltpu


_INV_SQRT2 = 0.7071067811865476


def _gelu(x, approximate):
    if approximate:
        # Perf knob (semantics change up to ~1e-3 vs nn.GELU()'s exact erf):
        # tanh-GELU keeps the transcendental on the EUP slot instead of a
        # VALU erf polynomial. Off by default.
        return jax.nn.gelu(x, approximate=True)
    # nn.GELU() default is the exact erf formulation.
    return 0.5 * x * (1.0 + jax.lax.erf(x * _INV_SQRT2))


def decoder_kernel(x_ref, w1_ref, b1_ref, w2_ref, b2_ref, o_ref, *, approximate):
    # x_ref: [tile, PACK*E] — PACK logical rows packed per 128-lane row.
    x = x_ref[...]
    # Linear(E,E) via the block-diagonal packed W1 (MXU, f32 accumulation).
    h = jnp.dot(x, w1_ref[...], preferred_element_type=jnp.float32) + b1_ref[...]
    # BatchNorm(bn_momentum=1.0) -> identity ; Dropout(0.0) -> identity.
    h = _gelu(h, approximate)
    # Linear(E,F) via the block-diagonal packed W2 -> [tile, PACK*F].
    y = jnp.dot(h, w2_ref[...], preferred_element_type=jnp.float32) + b2_ref[...]
    # IdentityScaler -> no-op.
    o_ref[...] = y.astype(o_ref.dtype)


def _round_up(x, m):
    return ((x + m - 1) // m) * m


@functools.partial(jax.jit, static_argnames=("max_tile_packed", "approximate_gelu"))
def decoder_forward(node_attr, w1, b1, w2, b2, *, max_tile_packed=2048,
                    approximate_gelu=False):
    BN, E = node_attr.shape
    F = w2.shape[1]

    # Pack PACK logical rows per 128-lane row so GELU and both matmuls are
    # lane-dense (E=32 -> PACK=4). Falls back to PACK=1 if E doesn't divide 128.
    PACK = 128 // E if (E < 128 and 128 % E == 0) else 1
    E_p, F_p = PACK * E, PACK * F

    # Tile selection over packed rows; pad BN so the tile always divides
    # (keeps the pipelined path for ragged BN instead of one huge block).
    packed_bn = -(-BN // PACK)  # ceil(BN / PACK)
    if packed_bn <= max_tile_packed:
        tile = _round_up(packed_bn, 8)
        padded_packed = tile
    else:
        tile = max_tile_packed
        padded_packed = _round_up(packed_bn, tile)
    bn_pad = padded_packed * PACK

    x = node_attr
    if bn_pad != BN:
        x = jnp.pad(x, ((0, bn_pad - BN), (0, 0)))
    # Contiguous row-major reshape: 4 logical rows per packed lane-row.
    x_packed = x.reshape(padded_packed, E_p)

    # Block-diagonal packed weights / tiled biases (tiny, built once per call).
    eye = jnp.eye(PACK, dtype=w1.dtype)
    w1_p = jnp.kron(eye, w1)                  # [E_p, E_p]
    w2_p = jnp.kron(eye, w2)                  # [E_p, F_p]
    b1_p = jnp.tile(b1, PACK).reshape(1, E_p)
    b2_p = jnp.tile(b2, PACK).reshape(1, F_p)

    grid = (padded_packed // tile,)
    kernel = functools.partial(decoder_kernel, approximate=approximate_gelu)

    out_packed = pl.pallas_call(
        kernel,
        out_shape=jax.ShapeDtypeStruct((padded_packed, F_p), node_attr.dtype),
        grid_spec=pltpu.PrefetchScalarGridSpec(
            num_scalar_prefetch=0,
            grid=grid,
            in_specs=[
                pl.BlockSpec((tile, E_p), lambda i: (i, 0)),   # packed x rows
                pl.BlockSpec((E_p, E_p), lambda i: (0, 0)),    # W1 (resident)
                pl.BlockSpec((1, E_p), lambda i: (0, 0)),      # b1
                pl.BlockSpec((E_p, F_p), lambda i: (0, 0)),    # W2 (resident)
                pl.BlockSpec((1, F_p), lambda i: (0, 0)),      # b2
            ],
            out_specs=pl.BlockSpec((tile, F_p), lambda i: (i, 0)),
        ),
        compiler_params=pltpu.CompilerParams(
            dimension_semantics=("parallel",),
            vmem_limit_bytes=32 * 1024 * 1024,
        ),
    )(x_packed, w1_p, b1_p, w2_p, b2_p)

    # Unpack: [padded_packed, PACK*F] -> [bn_pad, F] (contiguous reshape),
    # then drop padded rows. Restores the module's [BN, F] output contract.
    return out_packed.reshape(bn_pad, F)[:BN]


def reference_forward(node_attr, w1, b1, w2, b2):
    h = node_attr @ w1 + b1
    h = 0.5 * h * (1.0 + jax.lax.erf(h * _INV_SQRT2))
    return h @ w2 + b2


if __name__ == "__main__":
    # node_attr: [BN, node_embedding_dim] with BN = batch * num_nodes.
    node_embedding_dim = 32   # E
    node_feature_dim = 4      # F

    key = jax.random.PRNGKey(0)
    k_x, k_w1, k_b1, k_w2, k_b2 = jax.random.split(key, 5)

    # Deterministic parameter init (PyTorch Linear-style uniform bounds).
    bound = 1.0 / (node_embedding_dim ** 0.5)
    w1 = jax.random.uniform(k_w1, (node_embedding_dim, node_embedding_dim),
                            minval=-bound, maxval=bound, dtype=jnp.float32)
    b1 = jax.random.uniform(k_b1, (node_embedding_dim,),
                            minval=-bound, maxval=bound, dtype=jnp.float32)
    w2 = jax.random.uniform(k_w2, (node_embedding_dim, node_feature_dim),
                            minval=-bound, maxval=bound, dtype=jnp.float32)
    b2 = jax.random.uniform(k_b2, (node_feature_dim,),
                            minval=-bound, maxval=bound, dtype=jnp.float32)

    # Case 1: BN a multiple of the packing (PACK=4) -> lane-dense packed path
    # (256 rows -> 64 packed rows, single 64-row packed tile here; large BN
    # scales to 2048-packed-row tiles and a multi-step "parallel" grid).
    BN1 = 256  # e.g. batch=8 graphs x 32 nodes
    x1 = jax.random.normal(k_x, (BN1, node_embedding_dim), dtype=jnp.float32)
    out1 = jax.block_until_ready(decoder_forward(x1, w1, b1, w2, b2))
    ref1 = reference_forward(x1, w1, b1, w2, b2)
    assert out1.shape == (BN1, node_feature_dim)
    assert jnp.allclose(out1, ref1, atol=1e-5, rtol=1e-5), "mismatch vs. reference (packed)"

    # Case 2: ragged BN -> wrapper zero-pads to the packing/tile granularity
    # and slices the result (no single-huge-block fallback anymore).
    BN2 = 24
    x2 = x1[:BN2]
    out2 = jax.block_until_ready(decoder_forward(x2, w1, b1, w2, b2))
    ref2 = reference_forward(x2, w1, b1, w2, b2)
    assert out2.shape == (BN2, node_feature_dim)
    assert jnp.allclose(out2, ref2, atol=1e-5, rtol=1e-5), "mismatch vs. reference (ragged)"

    print("KERNEL_OK")
</pallas_src>

<mosaic_0001>
module attributes {stable_mosaic.version = 11 : i64} {
  func.func @decoder_kernel(%arg0: i32, %arg1: memref<64x128xf32, #tpu.memory_space<vmem>>, %arg2: memref<128x128xf32, #tpu.memory_space<vmem>>, %arg3: memref<1x128xf32, #tpu.memory_space<vmem>>, %arg4: memref<128x16xf32, #tpu.memory_space<vmem>>, %arg5: memref<1x16xf32, #tpu.memory_space<vmem>>, %arg6: memref<64x16xf32, #tpu.memory_space<vmem>>) attributes {dimension_semantics = [#tpu.dimension_semantics<parallel>], iteration_bounds = array<i64: 1>, scalar_prefetch = 0 : i64, scratch_operands = 0 : i64, tpu.core_type = #tpu.core_type<tc>, window_params = [{transform_indices = @transform_0, window_bounds = array<i64: 64, 128>}, {pipeline_mode = #tpu.pipeline_mode<synchronous>, transform_indices = @transform_1, window_bounds = array<i64: 128, 128>}, {pipeline_mode = #tpu.pipeline_mode<synchronous>, transform_indices = @transform_2, window_bounds = array<i64: 1, 128>}, {pipeline_mode = #tpu.pipeline_mode<synchronous>, transform_indices = @transform_3, window_bounds = array<i64: 128, 16>}, {pipeline_mode = #tpu.pipeline_mode<synchronous>, transform_indices = @transform_4, window_bounds = array<i64: 1, 16>}, {transform_indices = @transform_5, window_bounds = array<i64: 64, 16>}]} {
    %c0 = arith.constant 0 : index
    %c0_0 = arith.constant 0 : index
    %0 = vector.load %arg1[%c0, %c0_0] : memref<64x128xf32, #tpu.memory_space<vmem>>, vector<64x128xf32>
    %c0_1 = arith.constant 0 : index
    %c0_2 = arith.constant 0 : index
    %1 = vector.load %arg2[%c0_1, %c0_2] : memref<128x128xf32, #tpu.memory_space<vmem>>, vector<128x128xf32>
    %cst = arith.constant dense<0.000000e+00> : vector<64x128xf32>
    %2 = tpu.matmul %0, %1, %cst {dimension_numbers = #tpu.dot_dimension_numbers<[1], [0], [0], [1], [0, 0, 1, 1], [], []>} : vector<64x128xf32>, vector<128x128xf32>, vector<64x128xf32> -> vector<64x128xf32>
    %c0_3 = arith.constant 0 : index
    %c0_4 = arith.constant 0 : index
    %3 = vector.load %arg3[%c0_3, %c0_4] : memref<1x128xf32, #tpu.memory_space<vmem>>, vector<1x128xf32>
    %4 = vector.broadcast %3 : vector<1x128xf32> to vector<64x128xf32>
    %5 = arith.addf %2, %4 : vector<64x128xf32>
    %cst_5 = arith.constant 5.000000e-01 : f32
    %6 = vector.broadcast %cst_5 : f32 to vector<64x128xf32>
    %7 = arith.mulf %6, %5 : vector<64x128xf32>
    %cst_6 = arith.constant 0.707106769 : f32
    %8 = vector.broadcast %cst_6 : f32 to vector<64x128xf32>
    %9 = arith.mulf %5, %8 : vector<64x128xf32>
    %10 = math.erf %9 : vector<64x128xf32>
    %cst_7 = arith.constant 1.000000e+00 : f32
    %11 = vector.broadcast %cst_7 : f32 to vector<64x128xf32>
    %12 = arith.addf %11, %10 : vector<64x128xf32>
    %13 = arith.mulf %7, %12 : vector<64x128xf32>
    %c0_8 = arith.constant 0 : index
    %c0_9 = arith.constant 0 : index
    %14 = vector.load %arg4[%c0_8, %c0_9] : memref<128x16xf32, #tpu.memory_space<vmem>>, vector<128x16xf32>
    %cst_10 = arith.constant dense<0.000000e+00> : vector<64x16xf32>
    %15 = tpu.matmul %13, %14, %cst_10 {dimension_numbers = #tpu.dot_dimension_numbers<[1], [0], [0], [1], [0, 0, 1, 1], [], []>} : vector<64x128xf32>, vector<128x16xf32>, vector<64x16xf32> -> vector<64x16xf32>
    %c0_11 = arith.constant 0 : index
    %c0_12 = arith.constant 0 : index
    %16 = vector.load %arg5[%c0_11, %c0_12] : memref<1x16xf32, #tpu.memory_space<vmem>>, vector<1x16xf32>
    %17 = vector.broadcast %16 : vector<1x16xf32> to vector<64x16xf32>
    %18 = arith.addf %15, %17 : vector<64x16xf32>
    %c0_13 = arith.constant 0 : index
    %c0_14 = arith.constant 0 : index
    %19 = vector.load %arg6[%c0_13, %c0_14] : memref<64x16xf32, #tpu.memory_space<vmem>>, vector<64x16xf32>
    tpu.vector_store %arg6[%c0_13, %c0_14], %18 {strides = array<i32>} : memref<64x16xf32, #tpu.memory_space<vmem>>, vector<64x16xf32>,
    return
  }
  func.func @transform_0(%arg0: i32) -> (i32, i32) {
    %c0_i32 = arith.constant 0 : i32
    %c0_i32_0 = arith.constant 0 : i32
    return %arg0, %c0_i32 : i32, i32
  }
  func.func @transform_1(%arg0: i32) -> (i32, i32) {
    %c0_i32 = arith.constant 0 : i32
    %c0_i32_0 = arith.constant 0 : i32
    %c0_i32_1 = arith.constant 0 : i32
    return %c0_i32, %c0_i32_0 : i32, i32
  }
  func.func @transform_2(%arg0: i32) -> (i32, i32) {
    %c0_i32 = arith.constant 0 : i32
    %c0_i32_0 = arith.constant 0 : i32
    %c0_i32_1 = arith.constant 0 : i32
    return %c0_i32, %c0_i32_0 : i32, i32
  }
  func.func @transform_3(%arg0: i32) -> (i32, i32) {
    %c0_i32 = arith.constant 0 : i32
    %c0_i32_0 = arith.constant 0 : i32
    %c0_i32_1 = arith.constant 0 : i32
    return %c0_i32, %c0_i32_0 : i32, i32
  }
  func.func @transform_4(%arg0: i32) -> (i32, i32) {
    %c0_i32 = arith.constant 0 : i32
    %c0_i32_0 = arith.constant 0 : i32
    %c0_i32_1 = arith.constant 0 : i32
    return %c0_i32, %c0_i32_0 : i32, i32
  }
  func.func @transform_5(%arg0: i32) -> (i32, i32) {
    %c0_i32 = arith.constant 0 : i32
    %c0_i32_0 = arith.constant 0 : i32
    return %arg0, %c0_i32 : i32, i32
  }
}

</mosaic_0001>

<llo_original>
// kernel: tile.13
$region0: #{tile.13}
  #allocation0 [shape = 's32[1]{0}', space=sflag, size = 0x4, scoped, tag = 'scoped memory for tile.13']
  %s0 = inlined_call_operand.vmem [shape: f32[32], index: 0, kind: input, shape index: {}]
  %s1 = inlined_call_operand.vmem [shape: f32[4,32], index: 1, kind: output, shape index: {}]
  // Predicated region
  $region2: #{tile.13} parent=0 // pred_check
    _
  $region3: #{tile.13} parent=0 // pred_check_branch
    %3 = sbr.rel (0) target = $region5
  $region4: #{tile.13} parent=0 // pred_region
    _
  $region5: #{tile.13} parent=0 // pred_fallthru
    _
  %v4 = vld [vmem:[%s0] ss:$0 sm:$0xff]
  %5 = vst [vmem:[%s1] sm:$0xf] %v4

// kernel: tile.14
$region0: #{tile.14}
  %s0 = inlined_call_operand.vmem [shape: f32[4,32], index: 0, kind: input, shape index: {}]
  %s1 = inlined_call_operand.vmem [shape: f32[1,128], index: 1, kind: output, shape index: {}]
  $region1: #{tile.14} parent=0
    #allocation0 [shape = 'u8[4096]{0}', space=vmem, size = 0x1000, scoped, tag = 'scoped mem for output reshape']
    #allocation1 [shape = 'u8[4096]{0}', space=vmem, size = 0x1000, scoped, tag = 'scoped mem for input reshape']
    %s3 = sshll.u32 1, 4
    %s4 = ssub.s32 %s3, 1
    %v5 = vld [vmem:[%s0] sm:%s4]
    %6 = vst [vmem:[#allocation1] sm:%s4] %v5
    %v7 = vld [vmem:[#allocation1] sm:$0x1]
    %vm8 = vcmask 261120
    %9 = vst.msk [vmem:[#allocation0] sm:$0x1] %vm8, %v7
    %s10 = scalar_lea.vmem [#allocation1], 3
    %v11 = vld [vmem:[%s10] sm:$0x1]
    %12 = vrot.lane.b32.xlu0 %v11, 96
    %v13 = vpop.permute.xlu0 %12
    %vm14 = vcmask 1048320
    %15 = vst.msk [vmem:[#allocation0] sm:$0x1] %vm14, %v13
    %s16 = scalar_lea.vmem [#allocation1], 2
    %v17 = vld [vmem:[%s16] sm:$0x1]
    %18 = vrot.lane.b32.xlu0 %v17, 64
    %v19 = vpop.permute.xlu0 %18
    %vm20 = vcmask 785920
    %21 = vst.msk [vmem:[#allocation0] sm:$0x1] %vm20, %v19
    %s22 = scalar_lea.vmem [#allocation1], 1
    %v23 = vld [vmem:[%s22] sm:$0x1]
    %24 = vrot.lane.b32.xlu0 %v23, 32
    %v25 = vpop.permute.xlu0 %24
    %vm26 = vcmask 523520
    %27 = vst.msk [vmem:[#allocation0] sm:$0x1] %vm26, %v25
    %s29 = sshll.u32 1, 1
    %s30 = ssub.s32 %s29, 1
    %v32 = vld [vmem:[#allocation0] sm:%s30]
    %s33 = sshll.u32 1, 1
    %s34 = ssub.s32 %s33, 1
    %35 = vst [vmem:[%s1] sm:%s34] %v32

// kernel: tile.18
$region0: #{tile.18}
  #allocation0 [shape = 's32[1]{0}', space=sflag, size = 0x4, scoped, tag = 'scoped memory for tile.18']
  %s0 = inlined_call_operand.vmem [shape: f32[4], index: 0, kind: input, shape index: {}]
  %s1 = inlined_call_operand.vmem [shape: f32[4,4], index: 1, kind: output, shape index: {}]
  // Predicated region
  $region2: #{tile.18} parent=0 // pred_check
    _
  $region3: #{tile.18} parent=0 // pred_check_branch
    %3 = sbr.rel (0) target = $region5
  $region4: #{tile.18} parent=0 // pred_region
    _
  $region5: #{tile.18} parent=0 // pred_fallthru
    _
  %v4 = vld [vmem:[%s0] ss:$0 sm:$0xff]
  %5 = vst [vmem:[%s1] sm:$0xf] %v4

// kernel: tile.19
$region0: #{tile.19}
  %s0 = inlined_call_operand.vmem [shape: f32[4,4], index: 0, kind: input, shape index: {}]
  %s1 = inlined_call_operand.vmem [shape: f32[1,16], index: 1, kind: output, shape index: {}]
  $region1: #{tile.19} parent=0
    #allocation0 [shape = 'u8[4096]{0}', space=vmem, size = 0x1000, scoped, tag = 'scoped mem for output reshape']
    #allocation1 [shape = 'u8[4096]{0}', space=vmem, size = 0x1000, scoped, tag = 'scoped mem for input reshape']
    %s3 = sshll.u32 1, 4
    %s4 = ssub.s32 %s3, 1
    %v5 = vld [vmem:[%s0] sm:%s4]
    %6 = vst [vmem:[#allocation1] sm:%s4] %v5
    %v7 = vld [vmem:[#allocation1] sm:$0x1]
    %vm8 = vcmask 31744
    %9 = vst.msk [vmem:[#allocation0] sm:$0x1] %vm8, %v7
    %s10 = scalar_lea.vmem [#allocation1], 3
    %v11 = vld [vmem:[%s10] sm:$0x1]
    %12 = vrot.lane.b32.xlu0 %v11, 12
    %v13 = vpop.permute.xlu0 %12
    %vm14 = vcmask 130144
    %15 = vst.msk [vmem:[#allocation0] sm:$0x1] %vm14, %v13
    %s16 = scalar_lea.vmem [#allocation1], 2
    %v17 = vld [vmem:[%s16] sm:$0x1]
    %18 = vrot.lane.b32.xlu0 %v17, 8
    %v19 = vpop.permute.xlu0 %18
    %vm20 = vcmask 97344
    %21 = vst.msk [vmem:[#allocation0] sm:$0x1] %vm20, %v19
    %s22 = scalar_lea.vmem [#allocation1], 1
    %v23 = vld [vmem:[%s22] sm:$0x1]
    %24 = vrot.lane.b32.xlu0 %v23, 4
    %v25 = vpop.permute.xlu0 %24
    %vm26 = vcmask 64544
    %27 = vst.msk [vmem:[#allocation0] sm:$0x1] %vm26, %v25
    %s29 = sshll.u32 1, 1
    %s30 = ssub.s32 %s29, 1
    %v32 = vld [vmem:[#allocation0] sm:%s30]
    %s33 = sshll.u32 1, 1
    %s34 = ssub.s32 %s33, 1
    %35 = vst [vmem:[%s1] sm:%s34] %v32

// kernel: decoder_forward.1
$region0: #{decoder_forward.1}
  #allocation0 [shape = 'u32[]', space=smem, size = 0x4, offset = 0x4, fixed_abs, tag = 'smem constant byte address 0x4 - core index']
  #allocation1 [shape = 'u32[144,128]{1,0:T(1,128)}', space=vmem, size = 0x12000, scoped, tag = 'internal scratch']
  %s0 = inlined_call_operand.vmem [shape: f32[64,128], index: 0, kind: input, shape index: {}]
  %s1 = inlined_call_operand.vmem [shape: f32[128,128], index: 1, kind: input, shape index: {}]
  %s2 = inlined_call_operand.vmem [shape: f32[1,128], index: 2, kind: input, shape index: {}]
  %s3 = inlined_call_operand.vmem [shape: f32[128,16], index: 3, kind: input, shape index: {}]
  %s4 = inlined_call_operand.vmem [shape: f32[1,16], index: 4, kind: input, shape index: {}]
  %s5 = inlined_call_operand.vmem [shape: f32[64,16], index: 5, kind: output, shape index: {}]
  %s6 = sld [smem:[#allocation0]]
  $region30: #{decoder_forward.1} parent=0
    _
  %s8 = ssub.s32 1, %s6
  %s9 = scalar_select 0, %s8, %s6
  // Predicated region
  $region2: #{decoder_forward.1} parent=0 // pred_check
    _
  $region3: #{decoder_forward.1} parent=0 // pred_check_branch
    %11 = sbr.rel (0) target = $region5
  $region4: #{decoder_forward.1} parent=0 // pred_region
    _
  $region5: #{decoder_forward.1} parent=0 // pred_fallthru
    _
  // Predicated region
  $region6: #{decoder_forward.1} parent=0 // pred_check
    _
  $region7: #{decoder_forward.1} parent=0 // pred_check_branch
    %13 = sbr.rel (0) target = $region9
  $region8: #{decoder_forward.1} parent=0 // pred_region
    _
  $region9: #{decoder_forward.1} parent=0 // pred_fallthru
    _
  // Predicated region
  $region10: #{decoder_forward.1} parent=0 // pred_check
    _
  $region11: #{decoder_forward.1} parent=0 // pred_check_branch
    %15 = sbr.rel (0) target = $region13
  $region12: #{decoder_forward.1} parent=0 // pred_region
    _
  $region13: #{decoder_forward.1} parent=0 // pred_fallthru
    _
  // Predicated region
  $region14: #{decoder_forward.1} parent=0 // pred_check
    _
  $region15: #{decoder_forward.1} parent=0 // pred_check_branch
    %17 = sbr.rel (0) target = $region17
  $region16: #{decoder_forward.1} parent=0 // pred_region
    _
  $region17: #{decoder_forward.1} parent=0 // pred_fallthru
    _
  // Predicated region
  $region18: #{decoder_forward.1} parent=0 // pred_check
    _
  $region19: #{decoder_forward.1} parent=0 // pred_check_branch
    %19 = sbr.rel (0) target = $region21
  $region20: #{decoder_forward.1} parent=0 // pred_region
    _
  $region21: #{decoder_forward.1} parent=0 // pred_fallthru
    _
  %v20 = vld [vmem:[%s0] sm:$0xff]
  %v21 = vld [vmem:[%s0 + $0x8] sm:$0xff]
  %v22 = vld [vmem:[%s0 + $0x10] sm:$0xff]
  %v23 = vld [vmem:[%s0 + $0x18] sm:$0xff]
  %v24 = vld [vmem:[%s0 + $0x20] sm:$0xff]
  %v25 = vld [vmem:[%s0 + $0x28] sm:$0xff]
  %v26 = vld [vmem:[%s0 + $0x30] sm:$0xff]
  %v27 = vld [vmem:[%s0 + $0x38] sm:$0xff]
  %v28 = vld [vmem:[%s1] sm:$0xff]
  %v29 = vld [vmem:[%s1 + $0x8] sm:$0xff]
  %v30 = vld [vmem:[%s1 + $0x10] sm:$0xff]
  %v31 = vld [vmem:[%s1 + $0x18] sm:$0xff]
  %v32 = vld [vmem:[%s1 + $0x20] sm:$0xff]
  %v33 = vld [vmem:[%s1 + $0x28] sm:$0xff]
  %v34 = vld [vmem:[%s1 + $0x30] sm:$0xff]
  %v35 = vld [vmem:[%s1 + $0x38] sm:$0xff]
  %v36 = vld [vmem:[%s1 + $0x40] sm:$0xff]
  %v37 = vld [vmem:[%s1 + $0x48] sm:$0xff]
  %v38 = vld [vmem:[%s1 + $0x50] sm:$0xff]
  %v39 = vld [vmem:[%s1 + $0x58] sm:$0xff]
  %v40 = vld [vmem:[%s1 + $0x60] sm:$0xff]
  %v41 = vld [vmem:[%s1 + $0x68] sm:$0xff]
  %v42 = vld [vmem:[%s1 + $0x70] sm:$0xff]
  %v43 = vld [vmem:[%s1 + $0x78] sm:$0xff]
  %v44 = vld [vmem:[%s2] sm:$0x1]
  %v46 = vlaneseq
  %v47 = vshrl.u32 %v46, 7
  %v48 = vsub.s32 0, %v47
  %v49 = vrot.slane %v44, %v48
  %51 = vmatprep.subr.mxu0 0.0
  %52 = vmatpush1.msra.mxu0 %v43
  %53 = vmatprep.subr.mxu0 0.0
  %54 = vmatpush1.msra.mxu0 %v42
  %55 = vmatprep.subr.mxu0 0.0
  %56 = vmatpush1.msra.mxu0 %v41
  %57 = vmatprep.subr.mxu0 0.0
  %58 = vmatpush1.msra.mxu0 %v40
  %59 = vmatprep.subr.mxu0 0.0
  %60 = vmatpush1.msra.mxu0 %v39
  %61 = vmatprep.subr.mxu0 0.0
  %62 = vmatpush1.msra.mxu0 %v38
  %63 = vmatprep.subr.mxu0 0.0
  %64 = vmatpush1.msra.mxu0 %v37
  %65 = vmatprep.subr.mxu0 0.0
  %66 = vmatpush1.msra.mxu0 %v36
  %67 = vmatprep.subr.mxu0 0.0
  %68 = vmatpush1.msra.mxu0 %v35
  %69 = vmatprep.subr.mxu0 0.0
  %70 = vmatpush1.msra.mxu0 %v34
  %71 = vmatprep.subr.mxu0 0.0
  %72 = vmatpush1.msra.mxu0 %v33
  %73 = vmatprep.subr.mxu0 0.0
  %74 = vmatpush1.msra.mxu0 %v32
  %75 = vmatprep.subr.mxu0 0.0
  %76 = vmatpush1.msra.mxu0 %v31
  %77 = vmatprep.subr.mxu0 0.0
  %78 = vmatpush1.msra.mxu0 %v30
  %79 = vmatprep.subr.mxu0 0.0
  %80 = vmatpush1.msra.mxu0 %v29
  %81 = vmatprep.subr.mxu0 0.0
  %82 = vmatpush1.msra.mxu0 %v28
  %83 = vmatprep.subr.mxu0 0.0
  %84 = vmatpush2.msra.mxu0 0.0
  %85 = vmatprep.subr.mxu0 0.0
  %86 = vmatpush2.msra.mxu0 0.0
  %87 = vmatprep.subr.mxu0 0.0
  %88 = vmatpush2.msra.mxu0 0.0
  %89 = vmatprep.subr.mxu0 0.0
  %90 = vmatpush2.msra.mxu0 0.0
  %91 = vmatprep.subr.mxu0 0.0
  %92 = vmatpush2.msra.mxu0 0.0
  %93 = vmatprep.subr.mxu0 0.0
  %94 = vmatpush2.msra.mxu0 0.0
  %95 = vmatprep.subr.mxu0 0.0
  %96 = vmatpush2.msra.mxu0 0.0
  %97 = vmatprep.subr.mxu0 0.0
  %98 = vmatpush2.msra.mxu0 0.0
  %99 = vmatprep.subr.mxu0 0.0
  %100 = vmatpush2.msra.mxu0 0.0
  %101 = vmatprep.subr.mxu0 0.0
  %102 = vmatpush2.msra.mxu0 0.0
  %103 = vmatprep.subr.mxu0 0.0
  %104 = vmatpush2.msra.mxu0 0.0
  %105 = vmatprep.subr.mxu0 0.0
  %106 = vmatpush2.msra.mxu0 0.0
  %107 = vmatprep.subr.mxu0 0.0
  %108 = vmatpush2.msra.mxu0 0.0
  %109 = vmatprep.subr.mxu0 0.0
  %110 = vmatpush2.msra.mxu0 0.0
  %111 = vmatprep.subr.mxu0 0.0
  %112 = vmatpush2.msra.mxu0 0.0
  %113 = vmatprep.subr.mxu0 0.0
  %114 = vmatpush2.msra.mxu0 0.0
  %115 = vmatprep.mubr.f32.mxu0 0.0
  %116 = vmatmul.mubr.f32.gmra.mxu0 %v20
  %v117 = vpop.f32.mrf.mxu0
  %v118 = vadd.f32 %v49, %v117
  %v119 = vpop.f32.mrf.mxu0
  %120 = vmatprep.mubr.f32.mxu0 0.0
  %121 = vmatmul.mubr.f32.gmra.mxu0 %v21
  %v122 = vpop.f32.mrf.mxu0
  %v123 = vadd.f32 %v49, %v122
  %v124 = vpop.f32.mrf.mxu0
  %125 = vmatprep.mubr.f32.mxu0 0.0
  %126 = vmatmul.mubr.f32.gmra.mxu0 %v22
  %v127 = vpop.f32.mrf.mxu0
  %v128 = vadd.f32 %v49, %v127
  %v129 = vpop.f32.mrf.mxu0
  %130 = vmatprep.mubr.f32.mxu0 0.0
  %131 = vmatmul.mubr.f32.gmra.mxu0 %v23
  %v132 = vpop.f32.mrf.mxu0
  %v133 = vadd.f32 %v49, %v132
  %v134 = vpop.f32.mrf.mxu0
  %135 = vmatprep.mubr.f32.mxu0 0.0
  %136 = vmatmul.mubr.f32.gmra.mxu0 %v24
  %v137 = vpop.f32.mrf.mxu0
  %v138 = vadd.f32 %v49, %v137
  %v139 = vpop.f32.mrf.mxu0
  %140 = vmatprep.mubr.f32.mxu0 0.0
  %141 = vmatmul.mubr.f32.gmra.mxu0 %v25
  %v142 = vpop.f32.mrf.mxu0
  %v143 = vadd.f32 %v49, %v142
  %v144 = vpop.f32.mrf.mxu0
  %145 = vmatprep.mubr.f32.mxu0 0.0
  %146 = vmatmul.mubr.f32.gmra.mxu0 %v26
  %v147 = vpop.f32.mrf.mxu0
  %v148 = vadd.f32 %v49, %v147
  %v149 = vpop.f32.mrf.mxu0
  %150 = vmatprep.mubr.f32.mxu0 0.0
  %151 = vmatmul.mubr.f32.gmra.mxu0 %v27
  %v152 = vpop.f32.mrf.mxu0
  %v153 = vadd.f32 %v49, %v152
  %v154 = vpop.f32.mrf.mxu0
  %155 = vdwg.mxu0
  %v156 = vmul.f32 %v118, 0.5
  %v157 = vmul.f32 %v123, 0.5
  %v158 = vmul.f32 %v128, 0.5
  %v159 = vmul.f32 %v133, 0.5
  %v160 = vmul.f32 %v138, 0.5
  %v161 = vmul.f32 %v143, 0.5
  %v162 = vmul.f32 %v148, 0.5
  %v163 = vmul.f32 %v153, 0.5
  %v164 = vmul.f32 %v118, 0.70710677
  %v165 = vmul.f32 %v123, 0.70710677
  %v166 = vmul.f32 %v128, 0.70710677
  %v167 = vmul.f32 %v133, 0.70710677
  %v168 = vmul.f32 %v138, 0.70710677
  %v169 = vmul.f32 %v143, 0.70710677
  %v170 = vmul.f32 %v148, 0.70710677
  %v171 = vmul.f32 %v153, 0.70710677
  %v172 = verf.f32.pop %v164
  %v173 = verf.f32.pop %v165
  %v174 = verf.f32.pop %v166
  %v175 = verf.f32.pop %v167
  %v176 = verf.f32.pop %v168
  %v177 = verf.f32.pop %v169
  %v178 = verf.f32.pop %v170
  %v179 = verf.f32.pop %v171
  %v180 = vadd.f32 %v172, 1.0
  %v181 = vadd.f32 %v173, 1.0
  %v182 = vadd.f32 %v174, 1.0
  %v183 = vadd.f32 %v175, 1.0
  %v184 = vadd.f32 %v176, 1.0
  %v185 = vadd.f32 %v177, 1.0
  %v186 = vadd.f32 %v178, 1.0
  %v187 = vadd.f32 %v179, 1.0
  %v188 = vmul.f32 %v156, %v180
  %v189 = vmul.f32 %v157, %v181
  %v190 = vmul.f32 %v158, %v182
  %v191 = vmul.f32 %v159, %v183
  %v192 = vmul.f32 %v160, %v184
  %v193 = vmul.f32 %v161, %v185
  %v194 = vmul.f32 %v162, %v186
  %v195 = vmul.f32 %v163, %v187
  %v196 = vld [vmem:[%s3] sm:$0xff]
  %v197 = vld [vmem:[%s3 + $0x8] sm:$0xff]
  %v198 = vld [vmem:[%s3 + $0x10] sm:$0xff]
  %v199 = vld [vmem:[%s3 + $0x18] sm:$0xff]
  %v200 = vld [vmem:[%s3 + $0x20] sm:$0xff]
  %v201 = vld [vmem:[%s3 + $0x28] sm:$0xff]
  %v202 = vld [vmem:[%s3 + $0x30] sm:$0xff]
  %v203 = vld [vmem:[%s3 + $0x38] sm:$0xff]
  %v204 = vld [vmem:[%s3 + $0x40] sm:$0xff]
  %v205 = vld [vmem:[%s3 + $0x48] sm:$0xff]
  %v206 = vld [vmem:[%s3 + $0x50] sm:$0xff]
  %v207 = vld [vmem:[%s3 + $0x58] sm:$0xff]
  %v208 = vld [vmem:[%s3 + $0x60] sm:$0xff]
  %v209 = vld [vmem:[%s3 + $0x68] sm:$0xff]
  %v210 = vld [vmem:[%s3 + $0x70] sm:$0xff]
  %v211 = vld [vmem:[%s3 + $0x78] sm:$0xff]
  %v212 = vld [vmem:[%s4] sm:$0x1]
  %v214 = vlaneseq
  %v215 = vshrl.u32 %v214, 7
  %v216 = vsub.s32 0, %v215
  %v217 = vrot.slane %v212, %v216
  %219 = vmatprep.subr.mxu0 0.0
  %220 = vmatpush1.msra.mxu0 %v211
  %221 = vmatprep.subr.mxu0 0.0
  %222 = vmatpush1.msra.mxu0 %v210
  %223 = vmatprep.subr.mxu0 0.0
  %224 = vmatpush1.msra.mxu0 %v209
  %225 = vmatprep.subr.mxu0 0.0
  %226 = vmatpush1.msra.mxu0 %v208
  %227 = vmatprep.subr.mxu0 0.0
  %228 = vmatpush1.msra.mxu0 %v207
  %229 = vmatprep.subr.mxu0 0.0
  %230 = vmatpush1.msra.mxu0 %v206
  %231 = vmatprep.subr.mxu0 0.0
  %232 = vmatpush1.msra.mxu0 %v205
  %233 = vmatprep.subr.mxu0 0.0
  %234 = vmatpush1.msra.mxu0 %v204
  %235 = vmatprep.subr.mxu0 0.0
  %236 = vmatpush1.msra.mxu0 %v203
  %237 = vmatprep.subr.mxu0 0.0
  %238 = vmatpush1.msra.mxu0 %v202
  %239 = vmatprep.subr.mxu0 0.0
  %240 = vmatpush1.msra.mxu0 %v201
  %241 = vmatprep.subr.mxu0 0.0
  %242 = vmatpush1.msra.mxu0 %v200
  %243 = vmatprep.subr.mxu0 0.0
  %244 = vmatpush1.msra.mxu0 %v199
  %245 = vmatprep.subr.mxu0 0.0
  %246 = vmatpush1.msra.mxu0 %v198
  %247 = vmatprep.subr.mxu0 0.0
  %248 = vmatpush1.msra.mxu0 %v197
  %249 = vmatprep.subr.mxu0 0.0
  %250 = vmatpush1.msra.mxu0 %v196
  %251 = vmatprep.subr.mxu0 0.0
  %252 = vmatpush2.msra.mxu0 0.0
  %253 = vmatprep.subr.mxu0 0.0
  %254 = vmatpush2.msra.mxu0 0.0
  %255 = vmatprep.subr.mxu0 0.0
  %256 = vmatpush2.msra.mxu0 0.0
  %257 = vmatprep.subr.mxu0 0.0
  %258 = vmatpush2.msra.mxu0 0.0
  %259 = vmatprep.subr.mxu0 0.0
  %260 = vmatpush2.msra.mxu0 0.0
  %261 = vmatprep.subr.mxu0 0.0
  %262 = vmatpush2.msra.mxu0 0.0
  %263 = vmatprep.subr.mxu0 0.0
  %264 = vmatpush2.msra.mxu0 0.0
  %265 = vmatprep.subr.mxu0 0.0
  %266 = vmatpush2.msra.mxu0 0.0
  %267 = vmatprep.subr.mxu0 0.0
  %268 = vmatpush2.msra.mxu0 0.0
  %269 = vmatprep.subr.mxu0 0.0
  %270 = vmatpush2.msra.mxu0 0.0
  %271 = vmatprep.subr.mxu0 0.0
  %272 = vmatpush2.msra.mxu0 0.0
  %273 = vmatprep.subr.mxu0 0.0
  %274 = vmatpush2.msra.mxu0 0.0
  %275 = vmatprep.subr.mxu0 0.0
  %276 = vmatpush2.msra.mxu0 0.0
  %277 = vmatprep.subr.mxu0 0.0
  %278 = vmatpush2.msra.mxu0 0.0
  %279 = vmatprep.subr.mxu0 0.0
  %280 = vmatpush2.msra.mxu0 0.0
  %281 = vmatprep.subr.mxu0 0.0
  %282 = vmatpush2.msra.mxu0 0.0
  %283 = vmatprep.mubr.f32.mxu0 0.0
  %284 = vmatmul.mubr.f32.gmra.mxu0 %v188
  %v285 = vpop.f32.mrf.mxu0
  %v286 = vadd.f32 %v217, %v285
  %v287 = vpop.f32.mrf.mxu0
  %288 = vmatprep.mubr.f32.mxu0 0.0
  %289 = vmatmul.mubr.f32.gmra.mxu0 %v189
  %v290 = vpop.f32.mrf.mxu0
  %v291 = vadd.f32 %v217, %v290
  %v292 = vpop.f32.mrf.mxu0
  %293 = vmatprep.mubr.f32.mxu0 0.0
  %294 = vmatmul.mubr.f32.gmra.mxu0 %v190
  %v295 = vpop.f32.mrf.mxu0
  %v296 = vadd.f32 %v217, %v295
  %v297 = vpop.f32.mrf.mxu0
  %298 = vmatprep.mubr.f32.mxu0 0.0
  %299 = vmatmul.mubr.f32.gmra.mxu0 %v191
  %v300 = vpop.f32.mrf.mxu0
  %v301 = vadd.f32 %v217, %v300
  %v302 = vpop.f32.mrf.mxu0
  %303 = vmatprep.mubr.f32.mxu0 0.0
  %304 = vmatmul.mubr.f32.gmra.mxu0 %v192
  %v305 = vpop.f32.mrf.mxu0
  %v306 = vadd.f32 %v217, %v305
  %v307 = vpop.f32.mrf.mxu0
  %308 = vmatprep.mubr.f32.mxu0 0.0
  %309 = vmatmul.mubr.f32.gmra.mxu0 %v193
  %v310 = vpop.f32.mrf.mxu0
  %v311 = vadd.f32 %v217, %v310
  %v312 = vpop.f32.mrf.mxu0
  %313 = vmatprep.mubr.f32.mxu0 0.0
  %314 = vmatmul.mubr.f32.gmra.mxu0 %v194
  %v315 = vpop.f32.mrf.mxu0
  %v316 = vadd.f32 %v217, %v315
  %v317 = vpop.f32.mrf.mxu0
  %318 = vmatprep.mubr.f32.mxu0 0.0
  %319 = vmatmul.mubr.f32.gmra.mxu0 %v195
  %v320 = vpop.f32.mrf.mxu0
  %v321 = vadd.f32 %v217, %v320
  %v322 = vpop.f32.mrf.mxu0
  %323 = vdwg.mxu0
  %vm324 = vcmask 130048
  %325 = vst.msk [vmem:[%s5] sm:$0xff] %vm324, %v286
  %326 = vst.msk [vmem:[%s5 + $0x8] sm:$0xff] %vm324, %v291
  %327 = vst.msk [vmem:[%s5 + $0x10] sm:$0xff] %vm324, %v296
  %328 = vst.msk [vmem:[%s5 + $0x18] sm:$0xff] %vm324, %v301
  %329 = vst.msk [vmem:[%s5 + $0x20] sm:$0xff] %vm324, %v306
  %330 = vst.msk [vmem:[%s5 + $0x28] sm:$0xff] %vm324, %v311
  %331 = vst.msk [vmem:[%s5 + $0x30] sm:$0xff] %vm324, %v316
  %332 = vst.msk [vmem:[%s5 + $0x38] sm:$0xff] %vm324, %v321
  // Predicated region
  $region22: #{decoder_forward.1} parent=0 // pred_check
    _
  $region23: #{decoder_forward.1} parent=0 // pred_check_branch
    %334 = sbr.rel (0) target = $region25
  $region24: #{decoder_forward.1} parent=0 // pred_region
    _
  $region25: #{decoder_forward.1} parent=0 // pred_fallthru
    _
  // Predicated region
  $region26: #{decoder_forward.1} parent=0 // pred_check
    _
  $region27: #{decoder_forward.1} parent=0 // pred_check_branch
    %336 = sbr.rel (0) target = $region29
  $region28: #{decoder_forward.1} parent=0 // pred_region
    _
  $region29: #{decoder_forward.1} parent=0 // pred_fallthru
    _

</llo_original>
